<compile_context>
chip_gen: v7x
topology: tpu7x:2x2x1
jax: 0.10.0
libtpu: 0.0.40
codegen_flags: <defaults>
</compile_context>

<pallas_src>
import jax
import jax.numpy as jnp
from jax.experimental import pallas as pl
from jax.experimental.pallas import tpu as pltpu


def _round_up(x: int, m: int) -> int:
    return ((x + m - 1) // m) * m


def _cdiv(a: int, b: int) -> int:
    return (a + b - 1) // b


def _vmem_capacity_bytes() -> int:
    """Physical per-core VMEM; conservative v7x fallback if the query fails."""
    try:
        info = pltpu.get_tpu_info()
        cap = int(getattr(info, "vmem_capacity_bytes"))
        if cap > 0:
            return cap
    except Exception:
        pass
    return 64 * 1024 * 1024


def _fixed_op_linear_kernel(x_ref, w_ref, b_ref, o_ref):
    # x_ref: (TM, Hi) in the input dtype (f32) -> cast to the bf16 weight dtype on
    # the VPU (free; avoids a separate wrapper-side cast pass over x in HBM).
    # w_ref: (Hi, Ho) bf16, VMEM-resident across the grid.  b_ref: (1, Ho) f32.
    x = x_ref[...].astype(w_ref.dtype)
    acc = jnp.dot(x, w_ref[...], preferred_element_type=jnp.float32)
    o_ref[...] = (acc + b_ref[...]).astype(o_ref.dtype)


def _fixed_op_linear_kernel_nk(x_ref, w_ref, b_ref, o_ref, acc_ref):
    # Large-hidden path: grid (M, N, K) with K (reduction) last; f32 accumulator.
    k = pl.program_id(2)

    @pl.when(k == 0)
    def _():
        acc_ref[...] = jnp.zeros_like(acc_ref)

    x = x_ref[...].astype(w_ref.dtype)
    acc_ref[...] += jnp.dot(x, w_ref[...], preferred_element_type=jnp.float32)

    @pl.when(k == pl.num_programs(2) - 1)
    def _():
        o_ref[...] = (acc_ref[...] + b_ref[...]).astype(o_ref.dtype)


def fixed_op_forward(x, weight, bias, *, compute_dtype=jnp.bfloat16,
                     out_dtype=None, max_tm=1024):
    """FixedOp.forward(x) where the selected op is Linear(hidden_in, hidden_out).

    x:      (batch, seq, hidden_in)
    weight: (hidden_in, hidden_out)   -- transpose of torch nn.Linear .weight
    bias:   (hidden_out,)
    out_dtype: defaults to x.dtype (f32 semantics); pass jnp.bfloat16 to halve
               output writeback bytes when downstream ops tolerate it.
    """
    B, S, H_in = x.shape
    H_w_in, H_out = weight.shape
    assert H_w_in == H_in, "weight must be (hidden_in, hidden_out)"
    M = B * S
    out_dtype = x.dtype if out_dtype is None else out_dtype

    x_itemsize = jnp.dtype(x.dtype).itemsize
    w_itemsize = jnp.dtype(compute_dtype).itemsize
    out_itemsize = jnp.dtype(out_dtype).itemsize

    vmem_phys = _vmem_capacity_bytes()
    budget = (vmem_phys * 7) // 10        # what the tile-sizing math may consume
    vmem_limit = (vmem_phys * 17) // 20   # what we let the compiler allocate

    x2d = x.reshape(M, H_in)                       # free layout reshape; no cast
    w2d = weight.astype(compute_dtype)             # small one-time cast (resident)
    b2d = bias.reshape(1, H_out).astype(jnp.float32)

    def choose_tm(avail_bytes, per_row_bytes):
        tm = 8
        if avail_bytes > 0:
            tm = max(8, int(avail_bytes // per_row_bytes))
        tm = min(tm, int(max_tm))
        if M >= 512:
            # Keep >= 2 grid steps so the "parallel" axis shards across both
            # TensorCores on v7x (harmless on v5e/v6e).
            tm = min(tm, _round_up(_cdiv(M, 2), 256))
        tm = min(tm, _round_up(M, 8))
        return max(8, (tm // 8) * 8)

    # Pallas double-buffers every BlockSpec input, even with a constant index_map,
    # so the "resident" weight really costs 2x its size in VMEM.
    resident_w_bytes = 2 * H_in * H_out * w_itemsize + 2 * H_out * 4

    if resident_w_bytes <= budget // 2:
        # ---------- simple path: full weight resident, 1-D grid over M rows ------
        per_row = 2 * H_in * x_itemsize + 2 * H_out * out_itemsize
        TM = choose_tm(budget - resident_w_bytes, per_row)
        grid_m = _cdiv(M, TM)  # ragged last block: OOB reads unused, writes dropped

        out2d = pl.pallas_call(
            _fixed_op_linear_kernel,
            out_shape=jax.ShapeDtypeStruct((M, H_out), out_dtype),
            grid_spec=pltpu.PrefetchScalarGridSpec(
                num_scalar_prefetch=0,
                grid=(grid_m,),
                in_specs=[
                    pl.BlockSpec((TM, H_in), lambda i: (i, 0)),     # streamed rows
                    pl.BlockSpec((H_in, H_out), lambda i: (0, 0)),  # resident weight
                    pl.BlockSpec((1, H_out), lambda i: (0, 0)),     # resident bias
                ],
                out_specs=pl.BlockSpec((TM, H_out), lambda i: (i, 0)),
            ),
            compiler_params=pltpu.CompilerParams(
                dimension_semantics=("parallel",),
                vmem_limit_bytes=vmem_limit,
            ),
        )(x2d, w2d, b2d)
        return out2d.reshape(B, S, H_out)

    # ---------- large-hidden path: N/K grid tiling with f32 accumulator ----------
    TK = 512
    TN = 512
    Hi_pad = _round_up(H_in, TK)   # K must be block-aligned (zeros are exact)
    Ho_pad = _round_up(H_out, TN)

    if Hi_pad != H_in:
        x2d = jnp.pad(x2d, ((0, 0), (0, Hi_pad - H_in)))
    if Hi_pad != H_in or Ho_pad != H_out:
        w2d = jnp.pad(w2d, ((0, Hi_pad - H_in), (0, Ho_pad - H_out)))
        b2d = jnp.pad(b2d, ((0, 0), (0, Ho_pad - H_out)))

    per_row = 2 * TK * x_itemsize + 2 * TN * out_itemsize + TN * 4   # x, out, acc
    fixed = 2 * TK * TN * w_itemsize + 2 * TN * 4                    # w tile, bias
    TM = choose_tm(budget - fixed, per_row)
    grid = (_cdiv(M, TM), Ho_pad // TN, Hi_pad // TK)

    out2d = pl.pallas_call(
        _fixed_op_linear_kernel_nk,
        out_shape=jax.ShapeDtypeStruct((M, Ho_pad), out_dtype),
        grid_spec=pltpu.PrefetchScalarGridSpec(
            num_scalar_prefetch=0,
            grid=grid,
            in_specs=[
                pl.BlockSpec((TM, TK), lambda i, j, k: (i, k)),
                pl.BlockSpec((TK, TN), lambda i, j, k: (k, j)),
                pl.BlockSpec((1, TN), lambda i, j, k: (0, j)),
            ],
            out_specs=pl.BlockSpec((TM, TN), lambda i, j, k: (i, j)),
            scratch_shapes=[pltpu.VMEM((TM, TN), jnp.float32)],
        ),
        compiler_params=pltpu.CompilerParams(
            dimension_semantics=("parallel", "parallel", "arbitrary"),
            vmem_limit_bytes=vmem_limit,
        ),
    )(x2d, w2d, b2d)

    if Ho_pad != H_out:
        out2d = out2d[:, :H_out]
    return out2d.reshape(B, S, H_out)


def _reference(x, w, b):
    """Plain-JAX reference with matching bf16 operand rounding + f32 accumulation."""
    xb = x.astype(jnp.bfloat16).astype(jnp.float32)
    wb = w.astype(jnp.bfloat16).astype(jnp.float32)
    B, S, H_in = x.shape
    H_out = w.shape[1]
    return (xb.reshape(-1, H_in) @ wb + b).reshape(B, S, H_out)


if __name__ == "__main__":
    key = jax.random.PRNGKey(0)
    k_x, k_w, k_b, k_x2, k_w2, k_b2 = jax.random.split(key, 6)

    # --- Test 1: DARTS-default small shape (batch=2, seq=8, hidden=32) -----------
    batch, seq, hidden = 2, 8, 32
    x = jax.random.normal(k_x, (batch, seq, hidden), dtype=jnp.float32)
    # torch nn.Linear weight is (out, in); we store its transpose (in, out).
    w = (jax.random.uniform(k_w, (hidden, hidden), dtype=jnp.float32) - 0.5) * (
        2.0 / jnp.sqrt(hidden)
    )
    b = (jax.random.uniform(k_b, (hidden,), dtype=jnp.float32) - 0.5) * (
        2.0 / jnp.sqrt(hidden)
    )

    out = fixed_op_forward(x, w, b)
    jax.block_until_ready(out)
    assert out.shape == (batch, seq, hidden) and out.dtype == x.dtype
    ref = _reference(x, w, b)
    assert jnp.allclose(out, ref, atol=1e-2, rtol=1e-2), "mismatch vs bf16 reference"
    ref_f32 = (x.reshape(-1, hidden) @ w + b).reshape(batch, seq, hidden)
    assert jnp.allclose(out, ref_f32, atol=5e-2, rtol=5e-2), "mismatch vs f32 reference"

    # --- Test 2: ragged M / multi-step grid (exercises the software pipeline) ----
    b2_, s2_, hi2, ho2 = 3, 7, 20, 20   # M=21, force TM=8 -> grid_m=3, ragged tail
    x2 = jax.random.normal(k_x2, (b2_, s2_, hi2), dtype=jnp.float32)
    w2 = (jax.random.uniform(k_w2, (hi2, ho2), dtype=jnp.float32) - 0.5) * 0.4
    bb2 = (jax.random.uniform(k_b2, (ho2,), dtype=jnp.float32) - 0.5) * 0.4

    out2 = fixed_op_forward(x2, w2, bb2, max_tm=8)
    jax.block_until_ready(out2)
    ref2 = _reference(x2, w2, bb2)
    assert jnp.allclose(out2, ref2, atol=1e-2, rtol=1e-2), "mismatch (ragged grid)"

    print("KERNEL_OK")
</pallas_src>

<mosaic_0001>
module attributes {stable_mosaic.version = 11 : i64} {
  func.func @_fixed_op_linear_kernel(%arg0: i32, %arg1: memref<16x32xf32, #tpu.memory_space<vmem>>, %arg2: memref<32x32xbf16, #tpu.memory_space<vmem>>, %arg3: memref<1x32xf32, #tpu.memory_space<vmem>>, %arg4: memref<16x32xf32, #tpu.memory_space<vmem>>) attributes {dimension_semantics = [#tpu.dimension_semantics<parallel>], iteration_bounds = array<i64: 1>, scalar_prefetch = 0 : i64, scratch_operands = 0 : i64, tpu.core_type = #tpu.core_type<tc>, window_params = [{transform_indices = @transform_0, window_bounds = array<i64: 16, 32>}, {pipeline_mode = #tpu.pipeline_mode<synchronous>, transform_indices = @transform_1, window_bounds = array<i64: 32, 32>}, {pipeline_mode = #tpu.pipeline_mode<synchronous>, transform_indices = @transform_2, window_bounds = array<i64: 1, 32>}, {transform_indices = @transform_3, window_bounds = array<i64: 16, 32>}]} {
    %c0 = arith.constant 0 : index
    %c0_0 = arith.constant 0 : index
    %0 = vector.load %arg1[%c0, %c0_0] : memref<16x32xf32, #tpu.memory_space<vmem>>, vector<16x32xf32>
    %1 = arith.truncf %0 : vector<16x32xf32> to vector<16x32xbf16>
    %c0_1 = arith.constant 0 : index
    %c0_2 = arith.constant 0 : index
    %2 = vector.load %arg2[%c0_1, %c0_2] : memref<32x32xbf16, #tpu.memory_space<vmem>>, vector<32x32xbf16>
    %cst = arith.constant dense<0.000000e+00> : vector<16x32xf32>
    %3 = tpu.matmul %1, %2, %cst {dimension_numbers = #tpu.dot_dimension_numbers<[1], [0], [0], [1], [0, 0, 1, 1], [], []>} : vector<16x32xbf16>, vector<32x32xbf16>, vector<16x32xf32> -> vector<16x32xf32>
    %c0_3 = arith.constant 0 : index
    %c0_4 = arith.constant 0 : index
    %4 = vector.load %arg3[%c0_3, %c0_4] : memref<1x32xf32, #tpu.memory_space<vmem>>, vector<1x32xf32>
    %5 = vector.broadcast %4 : vector<1x32xf32> to vector<16x32xf32>
    %6 = arith.addf %3, %5 : vector<16x32xf32>
    %c0_5 = arith.constant 0 : index
    %c0_6 = arith.constant 0 : index
    %7 = vector.load %arg4[%c0_5, %c0_6] : memref<16x32xf32, #tpu.memory_space<vmem>>, vector<16x32xf32>
    tpu.vector_store %arg4[%c0_5, %c0_6], %6 {strides = array<i32>} : memref<16x32xf32, #tpu.memory_space<vmem>>, vector<16x32xf32>,
    return
  }
  func.func @transform_0(%arg0: i32) -> (i32, i32) {
    %c0_i32 = arith.constant 0 : i32
    %c0_i32_0 = arith.constant 0 : i32
    return %arg0, %c0_i32 : i32, i32
  }
  func.func @transform_1(%arg0: i32) -> (i32, i32) {
    %c0_i32 = arith.constant 0 : i32
    %c0_i32_0 = arith.constant 0 : i32
    %c0_i32_1 = arith.constant 0 : i32
    return %c0_i32, %c0_i32_0 : i32, i32
  }
  func.func @transform_2(%arg0: i32) -> (i32, i32) {
    %c0_i32 = arith.constant 0 : i32
    %c0_i32_0 = arith.constant 0 : i32
    %c0_i32_1 = arith.constant 0 : i32
    return %c0_i32, %c0_i32_0 : i32, i32
  }
  func.func @transform_3(%arg0: i32) -> (i32, i32) {
    %c0_i32 = arith.constant 0 : i32
    %c0_i32_0 = arith.constant 0 : i32
    return %arg0, %c0_i32 : i32, i32
  }
}

</mosaic_0001>

<llo_original>
// kernel: tpu_custom_call.1
$region0: #{tpu_custom_call.1}
  #allocation0 [shape = 'u32[]', space=smem, size = 0x4, offset = 0x4, fixed_abs, tag = 'smem constant byte address 0x4 - core index']
  #allocation1 [shape = 'u32[144,128]{1,0:T(1,128)}', space=vmem, size = 0x12000, scoped, tag = 'internal scratch']
  %s0 = inlined_call_operand.hbm [shape: f32[16,32], index: 0, kind: input, shape index: {}]
  %s1 = inlined_call_operand.hbm [shape: bf16[32,32], index: 1, kind: input, shape index: {}]
  %s2 = inlined_call_operand.vmem [shape: f32[1,32], index: 2, kind: input, shape index: {}]
  %s3 = inlined_call_operand.hbm [shape: f32[16,32], index: 3, kind: output, shape index: {}]
  %s4 = sld [smem:[#allocation0]]
  $region30: #{tpu_custom_call.1} parent=0
    _
  %s6 = ssub.s32 1, %s4
  %s7 = scalar_select 0, %s6, %s4
  $region1: #{tpu_custom_call.1} parent=0
    #allocation2 [shape = 'u8[8192]{0}', space=vmem, size = 0x2000, scoped, tag = 'input window, operand 0, single buffered']
    #allocation3 [shape = 's32[1]{0}', space=sflag, size = 0x4, scoped, tag = 'scoped memory for tpu_custom_call.1']
    #allocation4 [shape = 's32[1]{0}', space=sflag, size = 0x4, scoped, tag = 'scoped memory for tpu_custom_call.1']
    #allocation5 [shape = 'u8[8192]{0}', space=vmem, size = 0x2000, scoped, tag = 'input window, operand 1, single buffered']
    #allocation6 [shape = 's32[1]{0}', space=sflag, size = 0x4, scoped, tag = 'scoped memory for tpu_custom_call.1']
    #allocation7 [shape = 'u8[8192]{0}', space=vmem, size = 0x2000, scoped, tag = 'output window, operand 0, single buffered']
    %8 = vsyncpa [#allocation3], 0
    %9 = vsyncpa [#allocation6], 0
    %10 = vsyncpa [#allocation4], 0
    // Predicated region
    $region2: #{tpu_custom_call.1} parent=1 // pred_check
      _
    $region3: #{tpu_custom_call.1} parent=1 // pred_check_branch
      %12 = sbr.rel (0) target = $region5
    $region4: #{tpu_custom_call.1} parent=1 // pred_region
      %s14 = ssub.s32 256, 256
      %15 = vsyncadd [#allocation3], %s14
      %s16 = sshll.u32 [#allocation2], 4
      %s17 = int_to_ptr.vmem [resolvable:$true] %s16
      %22 = dma.hbm_to_vmem [thread:$0]  %s0, 256, %s17, [#allocation3], 128, 128, 8
    $region5: #{tpu_custom_call.1} parent=1 // pred_fallthru
      _
    // Predicated region
    $region6: #{tpu_custom_call.1} parent=1 // pred_check
      _
    $region7: #{tpu_custom_call.1} parent=1 // pred_check_branch
      %24 = sbr.rel (0) target = $region9
    $region8: #{tpu_custom_call.1} parent=1 // pred_region
      %s26 = ssub.s32 256, 256
      %27 = vsyncadd [#allocation6], %s26
      %s28 = sshll.u32 [#allocation5], 4
      %s29 = int_to_ptr.vmem [resolvable:$true] %s28
      %34 = dma.hbm_to_vmem [thread:$0]  %s1, 256, %s29, [#allocation6], 64, 64, 4
    $region9: #{tpu_custom_call.1} parent=1 // pred_fallthru
      _
    // Predicated region
    $region10: #{tpu_custom_call.1} parent=1 // pred_check
      _
    $region11: #{tpu_custom_call.1} parent=1 // pred_check_branch
      %36 = sbr.rel (0) target = $region13
    $region12: #{tpu_custom_call.1} parent=1 // pred_region
      _
    $region13: #{tpu_custom_call.1} parent=1 // pred_fallthru
      _
    // Predicated region
    $region14: #{tpu_custom_call.1} parent=1 // pred_check
      _
    $region15: #{tpu_custom_call.1} parent=1 // pred_check_branch
      %38 = sbr.rel (0) target = $region17
    $region16: #{tpu_custom_call.1} parent=1 // pred_region
      %39 = dma.done [#allocation3], 256
    $region17: #{tpu_custom_call.1} parent=1 // pred_fallthru
      _
    // Predicated region
    $region18: #{tpu_custom_call.1} parent=1 // pred_check
      _
    $region19: #{tpu_custom_call.1} parent=1 // pred_check_branch
      %41 = sbr.rel (0) target = $region21
    $region20: #{tpu_custom_call.1} parent=1 // pred_region
      %42 = dma.done [#allocation6], 256
    $region21: #{tpu_custom_call.1} parent=1 // pred_fallthru
      _
    %v44 = vld [vmem:[#allocation2] sm:$0xff]
    %v45 = vld [vmem:[#allocation2 + $0x8] sm:$0xff]
    %v46 = vpack.c.bf16 %v45, %v44
    %v47 = vld [vmem:[#allocation5] sm:$0xf]
    %v48 = vld [vmem:[#allocation5 + $0x4] sm:$0xf]
    %v49 = vld [vmem:[#allocation5 + $0x8] sm:$0xf]
    %v50 = vld [vmem:[#allocation5 + $0xc] sm:$0xf]
    %v51 = vld [vmem:[%s2] sm:$0x1]
    %v53 = vlaneseq
    %v54 = vshrl.u32 %v53, 7
    %v55 = vsub.s32 0, %v54
    %v56 = vrot.slane %v51, %v55
    %v62 = vunpack.c.l.b16 %v47
    %v63 = vunpack.c.l.b16 %v48
    %v64 = vunpack.c.l.b16 %v49
    %v65 = vunpack.c.l.b16 %v50
    %v66 = vpack.c.b16 %v63, %v62
    %v67 = vpack.c.b16 %v65, %v64
    %vm70 = vcmask 261120
    %v72 = vsel %vm70, %v46, 0
    %74 = vmatprep.subr.bf16.mxu0 0
    %75 = vmatpush1.bf16.msra.mxu0 %v66
    %76 = vmatprep.subr.bf16.mxu0 0
    %77 = vmatpush1.bf16.msra.mxu0 %v67
    %78 = vmatprep.subr.bf16.mxu0 0
    %79 = vmatpush1.bf16.msra.mxu0 0
    %80 = vmatprep.subr.bf16.mxu0 0
    %81 = vmatpush1.bf16.msra.mxu0 0
    %82 = vmatprep.subr.bf16.mxu0 0
    %83 = vmatpush1.bf16.msra.mxu0 0
    %84 = vmatprep.subr.bf16.mxu0 0
    %85 = vmatpush1.bf16.msra.mxu0 0
    %86 = vmatprep.subr.bf16.mxu0 0
    %87 = vmatpush1.bf16.msra.mxu0 0
    %88 = vmatprep.subr.bf16.mxu0 0
    %89 = vmatpush1.bf16.msra.mxu0 0
    %90 = vmatprep.subr.bf16.mxu0 0
    %91 = vmatpush1.bf16.msra.mxu0 0
    %92 = vmatprep.subr.bf16.mxu0 0
    %93 = vmatpush1.bf16.msra.mxu0 0
    %94 = vmatprep.subr.bf16.mxu0 0
    %95 = vmatpush1.bf16.msra.mxu0 0
    %96 = vmatprep.subr.bf16.mxu0 0
    %97 = vmatpush1.bf16.msra.mxu0 0
    %98 = vmatprep.subr.bf16.mxu0 0
    %99 = vmatpush1.bf16.msra.mxu0 0
    %100 = vmatprep.subr.bf16.mxu0 0
    %101 = vmatpush1.bf16.msra.mxu0 0
    %102 = vmatprep.subr.bf16.mxu0 0
    %103 = vmatpush1.bf16.msra.mxu0 0
    %104 = vmatprep.subr.bf16.mxu0 0
    %105 = vmatpush1.bf16.msra.mxu0 0
    %106 = vmatprep.mubr.bf16.mxu0 0
    %107 = vmatmul.mubr.bf16.gmra.mrb[0].mxu0 %v72
    %v108 = vpop.f32.mrb[0].mxu0
    %v109 = vadd.f32 %v56, %v108
    %v110 = vpop.f32.mrb[0].mxu0
    %v111 = vpop.f32.mrb[0].mxu0
    %v112 = vadd.f32 %v56, %v111
    %v113 = vpop.f32.mrb[0].mxu0
    %114 = vdwg.mxu0
    %115 = vst.msk [vmem:[#allocation7] sm:$0xff] %vm70, %v109
    %116 = vst.msk [vmem:[#allocation7 + $0x8] sm:$0xff] %vm70, %v112
    // Predicated region
    $region22: #{tpu_custom_call.1} parent=1 // pred_check
      _
    $region23: #{tpu_custom_call.1} parent=1 // pred_check_branch
      %118 = sbr.rel (0) target = $region25
    $region24: #{tpu_custom_call.1} parent=1 // pred_region
      %s120 = ssub.s32 256, 256
      %121 = vsyncadd [#allocation4], %s120
      %s122 = sshll.u32 [#allocation7], 4
      %s123 = int_to_ptr.vmem [resolvable:$true] %s122
      %128 = dma.vmem_to_hbm [thread:$0]  %s123, 256, %s3, [#allocation4], 128, 128, 8
    $region25: #{tpu_custom_call.1} parent=1 // pred_fallthru
      _
    // Predicated region
    $region26: #{tpu_custom_call.1} parent=1 // pred_check
      _
    $region27: #{tpu_custom_call.1} parent=1 // pred_check_branch
      %130 = sbr.rel (0) target = $region29
    $region28: #{tpu_custom_call.1} parent=1 // pred_region
      %131 = dma.done [#allocation4], 256
    $region29: #{tpu_custom_call.1} parent=1 // pred_fallthru
      _
    %132 = vsyncpa [#allocation3], 1
    %133 = vsyncpa [#allocation6], 1
    %134 = vsyncpa [#allocation4], 1

</llo_original>
